<compile_context>
chip_gen: v5e
topology: v5e:2x2
jax: 0.10.0
libtpu: 0.0.40
codegen_flags: <defaults>
</compile_context>

<pallas_src>
import functools

import jax
import jax.numpy as jnp
from jax.experimental import pallas as pl
from jax.experimental.pallas import tpu as pltpu


def _se_kernel(x_ref, w1t_ref, w2t_ref, o_ref, *, inv_hw):
    # x_ref: (bb, C, HW) in the activation's native dtype.
    # w1t_ref: (C, C//r), w2t_ref: (C//r, C)  (pre-transposed in the wrapper).
    x = x_ref[...]

    # Global average pool over the spatial lanes with an f32 accumulator.
    # Only the tiny (bb, C) result lives in f32; the block stays native dtype.
    pooled = jnp.sum(x, axis=-1, dtype=jnp.float32) * inv_hw          # (bb, C)

    w1t = w1t_ref[...].astype(jnp.float32)                            # (C, C//r)
    w2t = w2t_ref[...].astype(jnp.float32)                            # (C//r, C)

    # Linear(C -> C//r, no bias) + ReLU as a real MXU matmul over the batch block.
    h = jnp.dot(pooled, w1t, preferred_element_type=jnp.float32)      # (bb, C//r)
    h = jnp.maximum(h, 0.0)

    # Linear(C//r -> C, no bias) + hsigmoid = relu6(s + 3) / 6.
    s = jnp.dot(h, w2t, preferred_element_type=jnp.float32)           # (bb, C)
    s = jnp.clip(s + 3.0, 0.0, 6.0) * (1.0 / 6.0)

    # Per-channel rescale in the activation's native dtype (no f32 block copy).
    o_ref[...] = x * s.astype(o_ref.dtype)[:, :, None]


def _vmem_capacity_bytes():
    """Physical per-core VMEM; conservative fallback if the query fails."""
    try:
        cap = int(getattr(pltpu.get_tpu_info(), "vmem_capacity_bytes", 0) or 0)
        if cap > 0:
            return cap
    except Exception:
        pass
    return 64 * 1024 * 1024  # v7x-sized fallback (safe everywhere)


def se_model(x, w1, w2, *, max_batch_block=None):
    """SE block forward.

    x : (B, C, H, W)   activation (f32 or bf16)
    w1: (C//r, C)      nn.Linear weight (out_features, in_features), no bias
    w2: (C, C//r)      nn.Linear weight, no bias
    """
    B, C, H, W = x.shape
    HW = H * W
    itemsize = jnp.dtype(x.dtype).itemsize

    # Padded VMEM layout of one image's (C, HW) slab (sublane x lane tiling,
    # sub-32-bit dtypes pack along sublanes).
    sublane = max(8, 32 // itemsize)
    c_pad = -(-C // sublane) * sublane
    hw_pad = -(-HW // 128) * 128
    block_row_bytes = c_pad * hw_pad * itemsize

    # VMEM budget derived from the actual chip: total pipelined footprint is
    #   2 double-buffered input blocks + 2 output blocks (native dtype)
    #   + one possible f32 temp for the dtype-promoting reduce
    #   + double-buffered weights (+ margin).
    phys_vmem = _vmem_capacity_bytes()
    footprint_budget = min(48 << 20, int(phys_vmem * 0.6))
    vmem_limit = min(100 << 20, int(phys_vmem * 0.75))
    vmem_limit = max(vmem_limit, footprint_budget)

    w_itemsize = jnp.dtype(w1.dtype).itemsize
    overhead = 4 * (w1.size + w2.size) * w_itemsize + (1 << 20)
    per_image = 4 * block_row_bytes + c_pad * hw_pad * 4
    bb = max(1, min(128, (footprint_budget - overhead) // per_image))
    if max_batch_block is not None:
        bb = min(bb, int(max_batch_block))
    bb = max(1, min(bb, B))
    n_blocks = pl.cdiv(B, bb)

    # Contiguous last-dims merge; no padding, no post-slice.  Ragged batch
    # (bb not dividing B) is handled by Pallas boundary-block masking.
    x3 = x.reshape(B, C, HW)

    # Pre-transpose weights once so the kernel does plain (bb, C) @ (C, C//r)
    # and (bb, C//r) @ (C//r, C) matmuls; constant index_map keeps them resident.
    w1t = jnp.transpose(w1)                      # (C, C//r)
    w2t = jnp.transpose(w2)                      # (C//r, C)

    kernel = functools.partial(_se_kernel, inv_hw=1.0 / HW)

    c_red = int(w1.shape[0])
    flops = int(4 * B * C * c_red + 3 * B * C * HW)
    bytes_accessed = int(2 * B * C * HW * itemsize
                         + (w1.size + w2.size) * w_itemsize)

    out = pl.pallas_call(
        kernel,
        out_shape=jax.ShapeDtypeStruct((B, C, HW), x.dtype),
        grid_spec=pltpu.PrefetchScalarGridSpec(
            num_scalar_prefetch=0,
            grid=(n_blocks,),
            in_specs=[
                pl.BlockSpec((bb, C, HW), lambda b: (b, 0, 0)),
                pl.BlockSpec(w1t.shape, lambda b: (0, 0)),
                pl.BlockSpec(w2t.shape, lambda b: (0, 0)),
            ],
            out_specs=pl.BlockSpec((bb, C, HW), lambda b: (b, 0, 0)),
        ),
        compiler_params=pltpu.CompilerParams(
            dimension_semantics=("parallel",),
            vmem_limit_bytes=int(vmem_limit),
        ),
        cost_estimate=pl.CostEstimate(
            flops=flops, transcendentals=0, bytes_accessed=bytes_accessed),
    )(x3, w1t, w2t)

    return out.reshape(B, C, H, W)


def se_model_ref(x, w1, w2):
    """Pure-JAX reference mirroring the PyTorch SEModel forward."""
    pooled = jnp.mean(x.astype(jnp.float32), axis=(2, 3))    # (B, C)
    h = jnp.maximum(pooled @ w1.astype(jnp.float32).T, 0.0)  # (B, C//r)
    s = jnp.clip(h @ w2.astype(jnp.float32).T + 3.0, 0.0, 6.0) / 6.0
    return x.astype(jnp.float32) * s[:, :, None, None]


if __name__ == "__main__":
    key = jax.random.PRNGKey(0)
    kx, k1, k2, kx2 = jax.random.split(key, 4)

    B, C, H, W = 2, 16, 16, 16
    reduction = 4
    C_red = C // reduction

    x = jax.random.normal(kx, (B, C, H, W), dtype=jnp.float32)
    # nn.Linear weights: (out_features, in_features), bias=False
    w1 = jax.random.normal(k1, (C_red, C), dtype=jnp.float32) * 0.1
    w2 = jax.random.normal(k2, (C, C_red), dtype=jnp.float32) * 0.1

    # Case 1: lane-dense spatial (HW = 256), f32.
    out = jax.block_until_ready(se_model(x, w1, w2))
    ref = se_model_ref(x, w1, w2)
    assert jnp.allclose(out, ref, atol=1e-5, rtol=1e-5), "f32 lane-dense mismatch"

    # Case 2: non-multiple-of-128 spatial (HW = 64) and ragged batch, f32.
    x_small = jax.random.normal(kx2, (3, C, 8, 8), dtype=jnp.float32)
    ref_s = se_model_ref(x_small, w1, w2)
    out_s = jax.block_until_ready(se_model(x_small, w1, w2))
    assert jnp.allclose(out_s, ref_s, atol=1e-5, rtol=1e-5), "unpadded-HW mismatch"
    # Force bb=2 over B=3 so the boundary block exercises read/store masking.
    out_r = jax.block_until_ready(se_model(x_small, w1, w2, max_batch_block=2))
    assert jnp.allclose(out_r, ref_s, atol=1e-5, rtol=1e-5), "ragged-batch mismatch"

    # Case 3: bf16 activation traffic (pool/FC math stays f32 inside the kernel).
    xb, w1b, w2b = (a.astype(jnp.bfloat16) for a in (x, w1, w2))
    out_b = jax.block_until_ready(se_model(xb, w1b, w2b))
    ref_b = se_model_ref(xb, w1b, w2b)
    assert jnp.allclose(out_b.astype(jnp.float32), ref_b, atol=6e-2, rtol=6e-2), \
        "bf16 mismatch"

    print("KERNEL_OK")
</pallas_src>

<mosaic_0001>
module attributes {stable_mosaic.version = 11 : i64} {
  func.func @_se_kernel(%arg0: i32, %arg1: memref<2x16x256xf32, #tpu.memory_space<vmem>>, %arg2: memref<16x4xf32, #tpu.memory_space<vmem>>, %arg3: memref<4x16xf32, #tpu.memory_space<vmem>>, %arg4: memref<2x16x256xf32, #tpu.memory_space<vmem>>) attributes {dimension_semantics = [#tpu.dimension_semantics<parallel>], iteration_bounds = array<i64: 1>, scalar_prefetch = 0 : i64, scratch_operands = 0 : i64, tpu.core_type = #tpu.core_type<tc>, window_params = [{transform_indices = @transform_0, window_bounds = array<i64: 2, 16, 256>}, {pipeline_mode = #tpu.pipeline_mode<synchronous>, transform_indices = @transform_1, window_bounds = array<i64: 16, 4>}, {pipeline_mode = #tpu.pipeline_mode<synchronous>, transform_indices = @transform_2, window_bounds = array<i64: 4, 16>}, {transform_indices = @transform_3, window_bounds = array<i64: 2, 16, 256>}]} {
    %c0 = arith.constant 0 : index
    %c0_0 = arith.constant 0 : index
    %c0_1 = arith.constant 0 : index
    %0 = vector.load %arg1[%c0, %c0_0, %c0_1] : memref<2x16x256xf32, #tpu.memory_space<vmem>>, vector<2x16x256xf32>
    %cst = arith.constant dense<0.000000e+00> : vector<2x16xf32>
    %1 = vector.multi_reduction <add>, %0, %cst [2] : vector<2x16x256xf32> to vector<2x16xf32>
    %cst_2 = arith.constant 3.906250e-03 : f32
    %2 = vector.broadcast %cst_2 : f32 to vector<2x16xf32>
    %3 = arith.mulf %1, %2 : vector<2x16xf32>
    %c0_3 = arith.constant 0 : index
    %c0_4 = arith.constant 0 : index
    %4 = vector.load %arg2[%c0_3, %c0_4] : memref<16x4xf32, #tpu.memory_space<vmem>>, vector<16x4xf32>
    %c0_5 = arith.constant 0 : index
    %c0_6 = arith.constant 0 : index
    %5 = vector.load %arg3[%c0_5, %c0_6] : memref<4x16xf32, #tpu.memory_space<vmem>>, vector<4x16xf32>
    %cst_7 = arith.constant dense<0.000000e+00> : vector<2x4xf32>
    %6 = tpu.matmul %3, %4, %cst_7 {dimension_numbers = #tpu.dot_dimension_numbers<[1], [0], [0], [1], [0, 0, 1, 1], [], []>} : vector<2x16xf32>, vector<16x4xf32>, vector<2x4xf32> -> vector<2x4xf32>
    %cst_8 = arith.constant 0.000000e+00 : f32
    %7 = vector.broadcast %cst_8 : f32 to vector<2x4xf32>
    %8 = arith.maximumf %6, %7 : vector<2x4xf32>
    %cst_9 = arith.constant dense<0.000000e+00> : vector<2x16xf32>
    %9 = tpu.matmul %8, %5, %cst_9 {dimension_numbers = #tpu.dot_dimension_numbers<[1], [0], [0], [1], [0, 0, 1, 1], [], []>} : vector<2x4xf32>, vector<4x16xf32>, vector<2x16xf32> -> vector<2x16xf32>
    %cst_10 = arith.constant 3.000000e+00 : f32
    %10 = vector.broadcast %cst_10 : f32 to vector<2x16xf32>
    %11 = arith.addf %9, %10 : vector<2x16xf32>
    %cst_11 = arith.constant 0.000000e+00 : f32
    %cst_12 = arith.constant 6.000000e+00 : f32
    %12 = vector.broadcast %cst_11 : f32 to vector<2x16xf32>
    %13 = arith.maximumf %12, %11 : vector<2x16xf32>
    %14 = vector.broadcast %cst_12 : f32 to vector<2x16xf32>
    %15 = arith.minimumf %14, %13 : vector<2x16xf32>
    %cst_13 = arith.constant 0.166666672 : f32
    %16 = vector.broadcast %cst_13 : f32 to vector<2x16xf32>
    %17 = arith.mulf %15, %16 : vector<2x16xf32>
    %18 = vector.shape_cast %17 : vector<2x16xf32> to vector<2x16x1xf32>
    %19 = vector.broadcast %18 : vector<2x16x1xf32> to vector<2x16x256xf32>
    %20 = arith.mulf %0, %19 : vector<2x16x256xf32>
    %c0_14 = arith.constant 0 : index
    %c0_15 = arith.constant 0 : index
    %c0_16 = arith.constant 0 : index
    %21 = vector.load %arg4[%c0_14, %c0_15, %c0_16] : memref<2x16x256xf32, #tpu.memory_space<vmem>>, vector<2x16x256xf32>
    tpu.vector_store %arg4[%c0_14, %c0_15, %c0_16], %20 {strides = array<i32>} : memref<2x16x256xf32, #tpu.memory_space<vmem>>, vector<2x16x256xf32>,
    return
  }
  func.func @transform_0(%arg0: i32) -> (i32, i32, i32) {
    %c0_i32 = arith.constant 0 : i32
    %c0_i32_0 = arith.constant 0 : i32
    %c0_i32_1 = arith.constant 0 : i32
    return %arg0, %c0_i32, %c0_i32_0 : i32, i32, i32
  }
  func.func @transform_1(%arg0: i32) -> (i32, i32) {
    %c0_i32 = arith.constant 0 : i32
    %c0_i32_0 = arith.constant 0 : i32
    %c0_i32_1 = arith.constant 0 : i32
    return %c0_i32, %c0_i32_0 : i32, i32
  }
  func.func @transform_2(%arg0: i32) -> (i32, i32) {
    %c0_i32 = arith.constant 0 : i32
    %c0_i32_0 = arith.constant 0 : i32
    %c0_i32_1 = arith.constant 0 : i32
    return %c0_i32, %c0_i32_0 : i32, i32
  }
  func.func @transform_3(%arg0: i32) -> (i32, i32, i32) {
    %c0_i32 = arith.constant 0 : i32
    %c0_i32_0 = arith.constant 0 : i32
    %c0_i32_1 = arith.constant 0 : i32
    return %arg0, %c0_i32, %c0_i32_0 : i32, i32, i32
  }
}

</mosaic_0001>

<llo_original>
// kernel: tpu_custom_call.1
$region0: #{tpu_custom_call.1}
  #allocation0 [shape = 'u32[]', space=smem, size = 0x4, offset = 0x4, fixed_abs, tag = 'smem constant byte address 0x4 - core index']
  #allocation1 [shape = 'u32[72,128]{1,0:T(1,128)}', space=vmem, size = 0x9000, scoped, tag = 'internal scratch']
  %s0 = inlined_call_operand.hbm [shape: f32[2,16,256], index: 0, kind: input, shape index: {}]
  %s1 = inlined_call_operand.vmem [shape: f32[16,4], index: 1, kind: input, shape index: {}]
  %s2 = inlined_call_operand.vmem [shape: f32[4,16], index: 2, kind: input, shape index: {}]
  %s3 = inlined_call_operand.hbm [shape: f32[2,16,256], index: 3, kind: output, shape index: {}]
  %s4 = sld [smem:[#allocation0]]
  $region26: #{tpu_custom_call.1} parent=0
    _
  %s6 = ssub.s32 1, %s4
  %s7 = scalar_select 0, %s6, %s4
  $region1: #{tpu_custom_call.1} parent=0
    #allocation2 [shape = 'u8[32768]{0}', space=vmem, size = 0x8000, scoped, tag = 'input window, operand 0, single buffered']
    #allocation3 [shape = 's32[1]{0}', space=sflag, size = 0x4, scoped, tag = 'scoped memory for tpu_custom_call.1']
    #allocation4 [shape = 's32[1]{0}', space=sflag, size = 0x4, scoped, tag = 'scoped memory for tpu_custom_call.1']
    #allocation5 [shape = 'u8[32768]{0}', space=vmem, size = 0x8000, scoped, tag = 'output window, operand 0, single buffered']
    %8 = vsyncpa [#allocation3], 0
    %9 = vsyncpa [#allocation4], 0
    // Predicated region
    $region2: #{tpu_custom_call.1} parent=1 // pred_check
      _
    $region3: #{tpu_custom_call.1} parent=1 // pred_check_branch
      %11 = sbr.rel (0) target = $region5
    $region4: #{tpu_custom_call.1} parent=1 // pred_region
      %13 = vsyncadd [#allocation3], 0
      %s14 = sshll.u32 %s0, 4
      %s15 = int_to_ptr.hbm [resolvable:$true] %s14
      %s16 = sshll.u32 [#allocation2], 4
      %s17 = int_to_ptr.vmem [resolvable:$true] %s16
      %22 = dma.hbm_to_vmem [thread:$0]  %s15, 1024, %s17, [#allocation3], 256, 256, 16
    $region5: #{tpu_custom_call.1} parent=1 // pred_fallthru
      _
    // Predicated region
    $region6: #{tpu_custom_call.1} parent=1 // pred_check
      _
    $region7: #{tpu_custom_call.1} parent=1 // pred_check_branch
      %24 = sbr.rel (0) target = $region9
    $region8: #{tpu_custom_call.1} parent=1 // pred_region
      _
    $region9: #{tpu_custom_call.1} parent=1 // pred_fallthru
      _
    // Predicated region
    $region10: #{tpu_custom_call.1} parent=1 // pred_check
      _
    $region11: #{tpu_custom_call.1} parent=1 // pred_check_branch
      %26 = sbr.rel (0) target = $region13
    $region12: #{tpu_custom_call.1} parent=1 // pred_region
      _
    $region13: #{tpu_custom_call.1} parent=1 // pred_fallthru
      _
    // Predicated region
    $region14: #{tpu_custom_call.1} parent=1 // pred_check
      _
    $region15: #{tpu_custom_call.1} parent=1 // pred_check_branch
      %28 = sbr.rel (0) target = $region17
    $region16: #{tpu_custom_call.1} parent=1 // pred_region
      %30 = dma.done [#allocation3], 1024
    $region17: #{tpu_custom_call.1} parent=1 // pred_fallthru
      _
    %v31 = vld [vmem:[#allocation2] sm:$0xff]
    %v32 = vld [vmem:[#allocation2 + $0x8] sm:$0xff]
    %v33 = vld [vmem:[#allocation2 + $0x10] sm:$0xff]
    %v34 = vld [vmem:[#allocation2 + $0x18] sm:$0xff]
    %v35 = vld [vmem:[#allocation2 + $0x20] sm:$0xff]
    %v36 = vld [vmem:[#allocation2 + $0x28] sm:$0xff]
    %v37 = vld [vmem:[#allocation2 + $0x30] sm:$0xff]
    %v38 = vld [vmem:[#allocation2 + $0x38] sm:$0xff]
    %v39 = vadd.f32 %v31, %v32
    %40 = vadd.xlane.f32.xlu0 %v39
    %v41 = vpop.xlane.xlu0 %40
    %v42 = vadd.f32 %v33, %v34
    %43 = vadd.xlane.f32.xlu0 %v42
    %v44 = vpop.xlane.xlu0 %43
    %v45 = vadd.f32 %v35, %v36
    %46 = vadd.xlane.f32.xlu0 %v45
    %v47 = vpop.xlane.xlu0 %46
    %v48 = vadd.f32 %v37, %v38
    %49 = vadd.xlane.f32.xlu0 %v48
    %v50 = vpop.xlane.xlu0 %49
    %v51 = vmul.f32 %v41, 0.00390625
    %v52 = vmul.f32 %v44, 0.00390625
    %v53 = vmul.f32 %v47, 0.00390625
    %v54 = vmul.f32 %v50, 0.00390625
    %v55 = vld [vmem:[%s1] sm:$0xff]
    %v56 = vld [vmem:[%s1 + $0x8] sm:$0xff]
    %v57 = vld [vmem:[%s2] sm:$0xf]
    %v62 = vlaneseq
    %v63 = vand.u32 %v62, 127
    %v64 = vperm.slane %v51, %v63
    %v65 = vadd.s32 %v63, 4294967288
    %v66 = vperm.slane %v52, %v65
    %vm67 = vcmask 130112
    %v68 = vsel %vm67, %v66, %v64
    %v69 = vperm.slane %v53, %v63
    %v70 = vperm.slane %v54, %v65
    %v71 = vsel %vm67, %v70, %v69
    %vm72 = vcmask 1041409
    %v73 = vsel %vm72, %v71, %v68
    %vm74 = vcmask 130048
    %v75 = vsel %vm74, %v73, 0
    %77 = vmatpush.msra.mxu0 0.0
    %78 = vmatpush.msra.mxu0 0.0
    %79 = vmatpush.msra.mxu0 0.0
    %80 = vmatpush.msra.mxu0 0.0
    %81 = vmatpush.msra.mxu0 0.0
    %82 = vmatpush.msra.mxu0 0.0
    %83 = vmatpush.msra.mxu0 0.0
    %84 = vmatpush.msra.mxu0 0.0
    %85 = vmatpush.msra.mxu0 0.0
    %86 = vmatpush.msra.mxu0 0.0
    %87 = vmatpush.msra.mxu0 0.0
    %88 = vmatpush.msra.mxu0 0.0
    %89 = vmatpush.msra.mxu0 0.0
    %90 = vmatpush.msra.mxu0 0.0
    %91 = vmatpush.msra.mxu0 %v56
    %92 = vmatpush.msra.mxu0 %v55
    %93 = vmatmul.f32.gmra.mxu0 %v75
    %v94 = vpop.f32.mrf.mxu0
    %v95 = vadd.f32 0.0, %v94
    %96 = vdwg.mxu0
    %v97 = vmax.f32 %v95, 0.0
    %vm98 = vcmask 31744
    %v100 = vsel %vm98, %v97, 0
    %vm102 = vcmask 1043456
    %v104 = vsel %vm102, %v57, 0
    %106 = vmatpush.msra.mxu0 0.0
    %107 = vmatpush.msra.mxu0 0.0
    %108 = vmatpush.msra.mxu0 0.0
    %109 = vmatpush.msra.mxu0 0.0
    %110 = vmatpush.msra.mxu0 0.0
    %111 = vmatpush.msra.mxu0 0.0
    %112 = vmatpush.msra.mxu0 0.0
    %113 = vmatpush.msra.mxu0 0.0
    %114 = vmatpush.msra.mxu0 0.0
    %115 = vmatpush.msra.mxu0 0.0
    %116 = vmatpush.msra.mxu0 0.0
    %117 = vmatpush.msra.mxu0 0.0
    %118 = vmatpush.msra.mxu0 0.0
    %119 = vmatpush.msra.mxu0 0.0
    %120 = vmatpush.msra.mxu0 0.0
    %121 = vmatpush.msra.mxu0 %v104
    %122 = vmatmul.f32.gmra.mxu0 %v100
    %v123 = vpop.f32.mrf.mxu0
    %v124 = vadd.f32 3.0, %v123
    %125 = vdwg.mxu0
    %v126 = vmax.f32 %v124, 0.0
    %v127 = vmin.f32 %v126, 6.0
    %v128 = vmul.f32 %v127, 0.16666667
    %v129 = vperm.slane %v128, 0
    %v130 = vlaneseq
    %v131 = vshrl.u32 %v130, 7
    %133 = vset.pattern.permute.xlu0 %v131
    %134 = vperm.xlu0 %133, %v129
    %v135 = vpop.permute.xlu0 %134
    %v136 = vlaneseq
    %v137 = vshrl.u32 %v136, 7
    %v138 = vadd.s32 %v137, 8
    %139 = vset.pattern.permute.xlu0 %v138
    %140 = vperm.xlu0 %139, %v129
    %v141 = vpop.permute.xlu0 %140
    %v142 = vperm.slane %v128, 1
    %v143 = vlaneseq
    %v144 = vshrl.u32 %v143, 7
    %146 = vset.pattern.permute.xlu0 %v144
    %147 = vperm.xlu0 %146, %v142
    %v148 = vpop.permute.xlu0 %147
    %v149 = vlaneseq
    %v150 = vshrl.u32 %v149, 7
    %v151 = vadd.s32 %v150, 8
    %152 = vset.pattern.permute.xlu0 %v151
    %153 = vperm.xlu0 %152, %v142
    %v154 = vpop.permute.xlu0 %153
    %v155 = vmul.f32 %v31, %v135
    %v156 = vmul.f32 %v32, %v135
    %v157 = vmul.f32 %v33, %v141
    %v158 = vmul.f32 %v34, %v141
    %v159 = vmul.f32 %v35, %v148
    %v160 = vmul.f32 %v36, %v148
    %v161 = vmul.f32 %v37, %v154
    %v162 = vmul.f32 %v38, %v154
    %163 = vst [vmem:[#allocation5] sm:$0xff] %v155
    %164 = vst [vmem:[#allocation5 + $0x8] sm:$0xff] %v156
    %165 = vst [vmem:[#allocation5 + $0x10] sm:$0xff] %v157
    %166 = vst [vmem:[#allocation5 + $0x18] sm:$0xff] %v158
    %167 = vst [vmem:[#allocation5 + $0x20] sm:$0xff] %v159
    %168 = vst [vmem:[#allocation5 + $0x28] sm:$0xff] %v160
    %169 = vst [vmem:[#allocation5 + $0x30] sm:$0xff] %v161
    %170 = vst [vmem:[#allocation5 + $0x38] sm:$0xff] %v162
    // Predicated region
    $region18: #{tpu_custom_call.1} parent=1 // pred_check
      _
    $region19: #{tpu_custom_call.1} parent=1 // pred_check_branch
      %172 = sbr.rel (0) target = $region21
    $region20: #{tpu_custom_call.1} parent=1 // pred_region
      %174 = vsyncadd [#allocation4], 0
      %s175 = sshll.u32 [#allocation5], 4
      %s176 = int_to_ptr.vmem [resolvable:$true] %s175
      %s177 = sshll.u32 %s3, 4
      %s178 = int_to_ptr.hbm [resolvable:$true] %s177
      %183 = dma.vmem_to_hbm [thread:$0]  %s176, 1024, %s178, [#allocation4], 256, 256, 16
    $region21: #{tpu_custom_call.1} parent=1 // pred_fallthru
      _
    // Predicated region
    $region22: #{tpu_custom_call.1} parent=1 // pred_check
      _
    $region23: #{tpu_custom_call.1} parent=1 // pred_check_branch
      %185 = sbr.rel (0) target = $region25
    $region24: #{tpu_custom_call.1} parent=1 // pred_region
      %187 = dma.done [#allocation4], 1024
    $region25: #{tpu_custom_call.1} parent=1 // pred_fallthru
      _
    %188 = vsyncpa [#allocation3], 1
    %189 = vsyncpa [#allocation4], 1

</llo_original>
